<compile_context>
chip_gen: v5e
topology: v5e:2x2
jax: 0.10.0
libtpu: 0.0.40
codegen_flags: <defaults>
</compile_context>

<pallas_src>
import math
import numpy as np
import jax
import jax.numpy as jnp
from jax.experimental import pallas as pl
from jax.experimental.pallas import tpu as pltpu

BASIS = 15


def _round_up(v, m):
    return ((v + m - 1) // m) * m


# ----------------------------- constants ------------------------------------

def _make_constants(N):
    """All-{0,1} constant matrices (exact in bf16) for the lane-dense layout."""
    NN = N * N
    pos = np.arange(NN)
    i_idx = pos // N
    j_idx = pos % N
    diag = i_idx == j_idx

    # h(R, NN) @ A3e -> (R, 5N) = [diag | rowsum | colsum | sumdiag*1 | tot*1]
    # (all UNSCALED; 1/N, 1/N^2 are folded into the packed weights host-side)
    A3e = np.zeros((NN, 5 * N), np.float32)
    A3e[pos[diag], i_idx[diag]] = 1.0                       # diag extraction
    A3e[pos, N + i_idx] = 1.0                               # rowsum
    A3e[pos, 2 * N + j_idx] = 1.0                           # colsum
    A3e[np.ix_(pos[diag], 3 * N + np.arange(N))] = 1.0      # sumdiag (repeated)
    A3e[:, 4 * N:5 * N] = 1.0                               # total   (repeated)

    # [gd|gr|gc](D,3N) @ B_all -> (D, NN): diag-scatter / row-bcast / col-bcast
    B_all = np.zeros((3 * N, NN), np.float32)
    B_all[i_idx[diag], pos[diag]] = 1.0                     # BD: v[i] -> delta_ij v[i]
    B_all[N + i_idx, pos] = 1.0                             # BR: v[i] for all j
    B_all[2 * N + j_idx, pos] = 1.0                         # BC: v[j] for all i

    # y(., NN) @ P -> per-map transpose: (y@P)[., i*N+j] = y[., j*N+i]
    P = np.zeros((NN, NN), np.float32)
    P[j_idx * N + i_idx, pos] = 1.0
    return A3e, B_all, P


# ------------------------------ weight packing -------------------------------

def _pack_layer(coeffs, diag_bias, all_bias, N, bb, Cp, Dp):
    """Pack one layer's parameters.

    Returns:
      w_stack_bd: (3*bb*Dp, bb*(5Cp+8))  -- 13 broadcast-type basis ops + both
                  biases, kron'ed over the batch block (row order: diag-kind,
                  row-kind, col-kind; (b, d) within each kind).
      w_dense_bd: dense ops 10/11, kron'ed; concatenated along columns when
                  Cp <= Dp (acts on [h; h@P]) else along rows (acts on h).

    F row layout per batch (matches the kernel): [diag(Cp) | rowsum(Cp) |
    colsum(Cp) | sumdiag(Cp) | tot(Cp) | ones(8)];  1/N, 1/N^2 scales are
    folded into the weight columns here (in f32).
    """
    C, D, _ = coeffs.shape
    fN = float(N)
    inv_n, inv_n2 = 1.0 / fN, 1.0 / (fN * fN)
    cT = jnp.transpose(coeffs.astype(jnp.float32), (2, 1, 0))       # (15, D, C)

    def pad_dc(w, scale=1.0):                                       # (D,C)->(Dp,Cp)
        return jnp.pad(w * scale, ((0, Dp - D), (0, Cp - C)))

    db = jnp.pad(diag_bias.reshape(D, 1).astype(jnp.float32), ((0, Dp - D), (0, 0)))
    ab = jnp.pad(all_bias.reshape(D, 1).astype(jnp.float32), ((0, Dp - D), (0, 0)))
    zcol = jnp.zeros((Dp, 1), jnp.float32)
    zpad = jnp.zeros((Dp, 7), jnp.float32)
    zblk = jnp.zeros((Dp, Cp), jnp.float32)

    # ops 1,3,4,2,5 live on the diagonal; 12,7,6,14,15 are row-broadcast;
    # 13,9,8 are col-broadcast (same mapping validated in Rev 2).
    w_diag = jnp.concatenate([pad_dc(cT[0]), pad_dc(cT[2], inv_n), pad_dc(cT[3], inv_n),
                              pad_dc(cT[1], inv_n), pad_dc(cT[4], inv_n2), db, zpad], axis=1)
    w_row = jnp.concatenate([pad_dc(cT[11]), pad_dc(cT[6], inv_n), pad_dc(cT[5], inv_n),
                             pad_dc(cT[13], inv_n), pad_dc(cT[14], inv_n2), ab, zpad], axis=1)
    w_col = jnp.concatenate([pad_dc(cT[12]), pad_dc(cT[8], inv_n), pad_dc(cT[7], inv_n),
                             zblk, zblk, zcol, zpad], axis=1)

    eye_b = jnp.eye(bb, dtype=jnp.float32)
    w_stack_bd = jnp.concatenate([jnp.kron(eye_b, w_diag),
                                  jnp.kron(eye_b, w_row),
                                  jnp.kron(eye_b, w_col)], axis=0)   # (3*bb*Dp, bb*(5Cp+8))

    w10 = jnp.kron(eye_b, pad_dc(cT[9]))                             # op10 (identity)
    w11 = jnp.kron(eye_b, pad_dc(cT[10]))                            # op11 (transpose)
    axis = 1 if Cp <= Dp else 0
    w_dense_bd = jnp.concatenate([w10, w11], axis=axis)
    return w_stack_bd, w_dense_bd


# ------------------------------- kernel -------------------------------------

def _make_net_kernel(layer_meta, bb, N, compute_dtype):
    """Fused multi-layer kernel over a block of bb batch elements.

    layer_meta = [(Cp, Dp, cp_le_dp)] per layer; all activations carried as
    (bb*Cp, N*N) f32 in registers/VMEM, batch-major rows.
    """
    NN = N * N
    num_layers = len(layer_meta)

    def kernel(x_ref, a3_ref, ball_ref, p_ref, *rest):
        w_refs = rest[:2 * num_layers]
        o_ref = rest[2 * num_layers]

        def mm(a, b):   # MXU matmul; operands in compute_dtype, f32 accumulation
            return jnp.dot(a.astype(compute_dtype), b.astype(compute_dtype),
                           preferred_element_type=jnp.float32)

        a3e = a3_ref[...]          # (NN, 5N)  {0,1}
        b_all = ball_ref[...]      # (3N, NN)  {0,1}
        p_mat = p_ref[...]         # (NN, NN)  {0,1} permutation
        ones_pad = jnp.ones((8, N), jnp.float32)   # bias row (+7 dead pad rows)

        h = x_ref[...].reshape(bb * layer_meta[0][0], NN).astype(jnp.float32)

        for l, (Cp, Dp, cp_le_dp) in enumerate(layer_meta):
            w_stack = w_refs[2 * l][...]            # (3*bb*Dp, bb*(5Cp+8))
            w_dense = w_refs[2 * l + 1][...]

            # --- per-position features (diag/rowsum/colsum/sumdiag/tot), one matmul
            feats = mm(h, a3e)                      # (bb*Cp, 5N)
            f_parts = []
            for b in range(bb):                     # aligned (Cp = multiple of 8) slices
                fb = feats[b * Cp:(b + 1) * Cp]
                f_parts += [fb[:, k * N:(k + 1) * N] for k in range(5)]
                f_parts.append(ones_pad)
            f_all = jnp.concatenate(f_parts, axis=0)        # (bb*(5Cp+8), N)

            # --- 13 broadcast-type basis ops + both biases: ONE channel-mix matmul
            g = mm(w_stack, f_all)                  # (3*bb*Dp, N): [gd; gr; gc]
            M = bb * Dp
            g_cat = jnp.concatenate([g[0:M], g[M:2 * M], g[2 * M:3 * M]], axis=1)  # (M, 3N)
            bcast = mm(g_cat, b_all)                # (M, NN): merged scatter matmul

            # --- dense ops 10 (identity) + 11 (transpose), @P on the min(C,D) side
            if cp_le_dp:
                hp = mm(h, p_mat)                                   # (bb*Cp, NN)
                dense = mm(w_dense, jnp.concatenate([h, hp], axis=0))   # (M, NN)
            else:
                y = mm(w_dense, h)                                  # (2M, NN)
                dense = y[0:M] + mm(y[M:2 * M], p_mat)              # (M, NN)

            # fused ReLU (every layer in MaronEquivNet2to2 is followed by ReLU)
            h = jnp.maximum(dense + bcast, 0.0)

        o_ref[...] = h.reshape(bb, layer_meta[-1][1], NN).astype(o_ref.dtype)

    return kernel


# ------------------------------- wrapper ------------------------------------

def maron_equiv_net_pallas(x, params, *, batch_block=None, compute_dtype=jnp.float32):
    """x: (B, C0, N, N) f32; params: list of (coeffs, diag_bias, all_bias).

    batch_block: batch elements folded into each grid step (must divide B).
      Default: largest divisor of B that is <= 8 (collapses the grid -> best
      MXU fill on single-TC v5e/v6e).  On v7x pass e.g. B//2 to keep both
      TensorCores busy.
    compute_dtype: MXU operand dtype (jnp.float32 default; jnp.bfloat16 cuts
      MXU passes ~3x — constants are exact in bf16, 1/N scales already folded
      into f32-built weights — at a small accuracy cost).
    """
    B, C0, N, _ = x.shape
    NN = N * N

    if batch_block is None:
        bb = 1
        for cand in range(min(B, 8), 0, -1):
            if B % cand == 0:
                bb = cand
                break
    else:
        bb = int(batch_block)
        assert B % bb == 0, "batch_block must divide B"
    nb = B // bb

    A3e, B_all, P = (jnp.asarray(m).astype(compute_dtype) for m in _make_constants(N))

    # pack weights (channels padded to multiples of 8, batch kron'ed)
    C0p = _round_up(C0, 8)
    layer_meta, w_inputs = [], []
    Cp, C_real = C0p, C0
    for coeffs, diag_bias, all_bias in params:
        C_in, D, _ = coeffs.shape
        assert C_in == C_real, "layer in_features mismatch"
        Dp = _round_up(D, 8)
        w_stack_bd, w_dense_bd = _pack_layer(coeffs, diag_bias, all_bias, N, bb, Cp, Dp)
        layer_meta.append((Cp, Dp, Cp <= Dp))
        w_inputs += [w_stack_bd.astype(compute_dtype), w_dense_bd.astype(compute_dtype)]
        Cp, C_real = Dp, D
    Dp_last, D_last = Cp, C_real

    # lane-dense, channel-padded input layout
    x_flat = jnp.pad(x, ((0, 0), (0, C0p - C0), (0, 0), (0, 0))).reshape(B, C0p, NN)

    in_specs = ([pl.BlockSpec((bb, C0p, NN), lambda g: (g, 0, 0))] +
                [pl.BlockSpec(A3e.shape, lambda g: (0, 0)),
                 pl.BlockSpec(B_all.shape, lambda g: (0, 0)),
                 pl.BlockSpec(P.shape, lambda g: (0, 0))] +
                [pl.BlockSpec(w.shape, lambda g: (0, 0)) for w in w_inputs])

    out_flat = pl.pallas_call(
        _make_net_kernel(layer_meta, bb, N, compute_dtype),
        out_shape=jax.ShapeDtypeStruct((B, Dp_last, NN), x.dtype),
        grid_spec=pltpu.PrefetchScalarGridSpec(
            num_scalar_prefetch=0,
            grid=(nb,),
            in_specs=in_specs,
            out_specs=pl.BlockSpec((bb, Dp_last, NN), lambda g: (g, 0, 0)),
        ),
        compiler_params=pltpu.CompilerParams(dimension_semantics=("parallel",)),
    )(x_flat, A3e, B_all, P, *w_inputs)

    return out_flat[:, :D_last].reshape(B, D_last, N, N)


# -------------------------- pure-JAX reference -------------------------------

def maron_equiv_layer_ref(x, coeffs, diag_bias, all_bias):
    B, C, N, _ = x.shape
    fN = float(N)
    eye = jnp.eye(N, dtype=x.dtype)
    diag = jnp.diagonal(x, axis1=-2, axis2=-1)
    sumdiag = diag.sum(-1, keepdims=True)
    rowsum = x.sum(-1)
    colsum = x.sum(-2)
    tot = rowsum.sum(-1)
    ops = [
        diag[..., None] * eye,
        (jnp.broadcast_to(sumdiag, (B, C, N))[..., None] * eye) / fN,
        (rowsum[..., None] * eye) / fN,
        (colsum[..., None] * eye) / fN,
        (jnp.broadcast_to(tot[..., None], (B, C, N))[..., None] * eye) / (fN * fN),
        jnp.broadcast_to(colsum[..., None], (B, C, N, N)) / fN,
        jnp.broadcast_to(rowsum[..., None], (B, C, N, N)) / fN,
        jnp.broadcast_to(colsum[:, :, None, :], (B, C, N, N)) / fN,
        jnp.broadcast_to(rowsum[:, :, None, :], (B, C, N, N)) / fN,
        x,
        jnp.swapaxes(x, -1, -2),
        jnp.broadcast_to(diag[..., None], (B, C, N, N)),
        jnp.broadcast_to(diag[:, :, None, :], (B, C, N, N)),
        jnp.broadcast_to(sumdiag[..., None], (B, C, N, N)) / fN,
        jnp.broadcast_to(tot[:, :, None, None], (B, C, N, N)) / (fN * fN),
    ]
    ops_out = jnp.stack(ops, 2)                             # (B, C, 15, N, N)
    out = jnp.einsum('dsb,ndbij->nsij', coeffs, ops_out,
                     precision=jax.lax.Precision.HIGHEST)
    return out + all_bias + eye[None, None, :, :] * diag_bias


def maron_equiv_net_ref(x, params):
    for coeffs, diag_bias, all_bias in params:
        x = jax.nn.relu(maron_equiv_layer_ref(x, coeffs, diag_bias, all_bias))
    return x


# -------------------------------- params -------------------------------------

def init_params(key, in_features, layers):
    """Shapes match MaronLinear2to2.__init__; biases random so those paths are
    exercised (the module inits them to zero)."""
    params = []
    feats = [in_features] + list(layers)
    for i in range(len(layers)):
        key, kc, kd, ka = jax.random.split(key, 4)
        c_in, c_out = feats[i], feats[i + 1]
        scale = math.sqrt(2.0 / float(c_in + c_out))
        coeffs = jax.random.normal(kc, (c_in, c_out, BASIS), jnp.float32) * scale
        diag_bias = 0.1 * jax.random.normal(kd, (1, c_out, 1, 1), jnp.float32)
        all_bias = 0.1 * jax.random.normal(ka, (1, c_out, 1, 1), jnp.float32)
        params.append((coeffs, diag_bias, all_bias))
    return params


if __name__ == "__main__":
    B, C, N = 2, 4, 16
    layers = [16, 8]

    key = jax.random.PRNGKey(0)
    kx, kp = jax.random.split(key)
    x = jax.random.normal(kx, (B, C, N, N), jnp.float32)
    params = init_params(kp, C, layers)

    net = jax.jit(lambda xx: maron_equiv_net_pallas(xx, params))
    out = jax.block_until_ready(net(x))
    ref = jax.block_until_ready(maron_equiv_net_ref(x, params))

    assert out.shape == (B, layers[-1], N, N), out.shape
    # f32 MXU operands + f32 accumulation vs the HIGHEST-precision XLA einsum:
    # a wrong basis-op mapping would miss by O(0.1-1), rounding by O(1e-5).
    np.testing.assert_allclose(np.asarray(out), np.asarray(ref), rtol=5e-3, atol=5e-3)
    print("KERNEL_OK")
</pallas_src>

<mosaic_0001>
module attributes {stable_mosaic.version = 11 : i64} {
  func.func @kernel(%arg0: i32, %arg1: memref<2x8x256xf32, #tpu.memory_space<vmem>>, %arg2: memref<256x80xf32, #tpu.memory_space<vmem>>, %arg3: memref<48x256xf32, #tpu.memory_space<vmem>>, %arg4: memref<256x256xf32, #tpu.memory_space<vmem>>, %arg5: memref<96x96xf32, #tpu.memory_space<vmem>>, %arg6: memref<32x32xf32, #tpu.memory_space<vmem>>, %arg7: memref<48x176xf32, #tpu.memory_space<vmem>>, %arg8: memref<32x32xf32, #tpu.memory_space<vmem>>, %arg9: memref<2x8x256xf32, #tpu.memory_space<vmem>>) attributes {dimension_semantics = [#tpu.dimension_semantics<parallel>], iteration_bounds = array<i64: 1>, scalar_prefetch = 0 : i64, scratch_operands = 0 : i64, tpu.core_type = #tpu.core_type<tc>, window_params = [{transform_indices = @transform_0, window_bounds = array<i64: 2, 8, 256>}, {pipeline_mode = #tpu.pipeline_mode<synchronous>, transform_indices = @transform_1, window_bounds = array<i64: 256, 80>}, {pipeline_mode = #tpu.pipeline_mode<synchronous>, transform_indices = @transform_2, window_bounds = array<i64: 48, 256>}, {pipeline_mode = #tpu.pipeline_mode<synchronous>, transform_indices = @transform_3, window_bounds = array<i64: 256, 256>}, {pipeline_mode = #tpu.pipeline_mode<synchronous>, transform_indices = @transform_4, window_bounds = array<i64: 96, 96>}, {pipeline_mode = #tpu.pipeline_mode<synchronous>, transform_indices = @transform_5, window_bounds = array<i64: 32, 32>}, {pipeline_mode = #tpu.pipeline_mode<synchronous>, transform_indices = @transform_6, window_bounds = array<i64: 48, 176>}, {pipeline_mode = #tpu.pipeline_mode<synchronous>, transform_indices = @transform_7, window_bounds = array<i64: 32, 32>}, {transform_indices = @transform_8, window_bounds = array<i64: 2, 8, 256>}]} {
    %c0 = arith.constant 0 : index
    %c0_0 = arith.constant 0 : index
    %0 = vector.load %arg2[%c0, %c0_0] : memref<256x80xf32, #tpu.memory_space<vmem>>, vector<256x80xf32>
    %c0_1 = arith.constant 0 : index
    %c0_2 = arith.constant 0 : index
    %1 = vector.load %arg3[%c0_1, %c0_2] : memref<48x256xf32, #tpu.memory_space<vmem>>, vector<48x256xf32>
    %c0_3 = arith.constant 0 : index
    %c0_4 = arith.constant 0 : index
    %2 = vector.load %arg4[%c0_3, %c0_4] : memref<256x256xf32, #tpu.memory_space<vmem>>, vector<256x256xf32>
    %cst = arith.constant 1.000000e+00 : f32
    %3 = vector.broadcast %cst : f32 to vector<8x16xf32>
    %c0_5 = arith.constant 0 : index
    %c0_6 = arith.constant 0 : index
    %c0_7 = arith.constant 0 : index
    %4 = vector.load %arg1[%c0_5, %c0_6, %c0_7] : memref<2x8x256xf32, #tpu.memory_space<vmem>>, vector<2x8x256xf32>
    %5 = vector.shape_cast %4 : vector<2x8x256xf32> to vector<16x256xf32>
    %c0_8 = arith.constant 0 : index
    %c0_9 = arith.constant 0 : index
    %6 = vector.load %arg5[%c0_8, %c0_9] : memref<96x96xf32, #tpu.memory_space<vmem>>, vector<96x96xf32>
    %c0_10 = arith.constant 0 : index
    %c0_11 = arith.constant 0 : index
    %7 = vector.load %arg6[%c0_10, %c0_11] : memref<32x32xf32, #tpu.memory_space<vmem>>, vector<32x32xf32>
    %cst_12 = arith.constant dense<0.000000e+00> : vector<16x80xf32>
    %8 = tpu.matmul %5, %0, %cst_12 {dimension_numbers = #tpu.dot_dimension_numbers<[1], [0], [0], [1], [0, 0, 1, 1], [], []>} : vector<16x256xf32>, vector<256x80xf32>, vector<16x80xf32> -> vector<16x80xf32>
    %9 = vector.extract_strided_slice %8 {offsets = [0, 0], sizes = [8, 80], strides = [1, 1]} : vector<16x80xf32> to vector<8x80xf32>
    %10 = vector.extract_strided_slice %9 {offsets = [0, 0], sizes = [8, 16], strides = [1, 1]} : vector<8x80xf32> to vector<8x16xf32>
    %11 = vector.extract_strided_slice %9 {offsets = [0, 16], sizes = [8, 16], strides = [1, 1]} : vector<8x80xf32> to vector<8x16xf32>
    %12 = vector.extract_strided_slice %9 {offsets = [0, 32], sizes = [8, 16], strides = [1, 1]} : vector<8x80xf32> to vector<8x16xf32>
    %13 = vector.extract_strided_slice %9 {offsets = [0, 48], sizes = [8, 16], strides = [1, 1]} : vector<8x80xf32> to vector<8x16xf32>
    %14 = vector.extract_strided_slice %9 {offsets = [0, 64], sizes = [8, 16], strides = [1, 1]} : vector<8x80xf32> to vector<8x16xf32>
    %15 = vector.extract_strided_slice %8 {offsets = [8, 0], sizes = [8, 80], strides = [1, 1]} : vector<16x80xf32> to vector<8x80xf32>
    %16 = vector.extract_strided_slice %15 {offsets = [0, 0], sizes = [8, 16], strides = [1, 1]} : vector<8x80xf32> to vector<8x16xf32>
    %17 = vector.extract_strided_slice %15 {offsets = [0, 16], sizes = [8, 16], strides = [1, 1]} : vector<8x80xf32> to vector<8x16xf32>
    %18 = vector.extract_strided_slice %15 {offsets = [0, 32], sizes = [8, 16], strides = [1, 1]} : vector<8x80xf32> to vector<8x16xf32>
    %19 = vector.extract_strided_slice %15 {offsets = [0, 48], sizes = [8, 16], strides = [1, 1]} : vector<8x80xf32> to vector<8x16xf32>
    %20 = vector.extract_strided_slice %15 {offsets = [0, 64], sizes = [8, 16], strides = [1, 1]} : vector<8x80xf32> to vector<8x16xf32>
    %21 = tpu.concatenate %10, %11, %12, %13, %14, %3, %16, %17, %18, %19, %20, %3 in 0 : vector<8x16xf32>, vector<8x16xf32>, vector<8x16xf32>, vector<8x16xf32>, vector<8x16xf32>, vector<8x16xf32>, vector<8x16xf32>, vector<8x16xf32>, vector<8x16xf32>, vector<8x16xf32>, vector<8x16xf32>, vector<8x16xf32> -> vector<96x16xf32>
    %cst_13 = arith.constant dense<0.000000e+00> : vector<96x16xf32>
    %22 = tpu.matmul %6, %21, %cst_13 {dimension_numbers = #tpu.dot_dimension_numbers<[1], [0], [0], [1], [0, 0, 1, 1], [], []>} : vector<96x96xf32>, vector<96x16xf32>, vector<96x16xf32> -> vector<96x16xf32>
    %23 = vector.extract_strided_slice %22 {offsets = [0, 0], sizes = [32, 16], strides = [1, 1]} : vector<96x16xf32> to vector<32x16xf32>
    %24 = vector.extract_strided_slice %22 {offsets = [32, 0], sizes = [32, 16], strides = [1, 1]} : vector<96x16xf32> to vector<32x16xf32>
    %25 = vector.extract_strided_slice %22 {offsets = [64, 0], sizes = [32, 16], strides = [1, 1]} : vector<96x16xf32> to vector<32x16xf32>
    %26 = tpu.concatenate %23, %24, %25 in 1 : vector<32x16xf32>, vector<32x16xf32>, vector<32x16xf32> -> vector<32x48xf32>
    %cst_14 = arith.constant dense<0.000000e+00> : vector<32x256xf32>
    %27 = tpu.matmul %26, %1, %cst_14 {dimension_numbers = #tpu.dot_dimension_numbers<[1], [0], [0], [1], [0, 0, 1, 1], [], []>} : vector<32x48xf32>, vector<48x256xf32>, vector<32x256xf32> -> vector<32x256xf32>
    %cst_15 = arith.constant dense<0.000000e+00> : vector<16x256xf32>
    %28 = tpu.matmul %5, %2, %cst_15 {dimension_numbers = #tpu.dot_dimension_numbers<[1], [0], [0], [1], [0, 0, 1, 1], [], []>} : vector<16x256xf32>, vector<256x256xf32>, vector<16x256xf32> -> vector<16x256xf32>
    %29 = tpu.concatenate %5, %28 in 0 : vector<16x256xf32>, vector<16x256xf32> -> vector<32x256xf32>
    %cst_16 = arith.constant dense<0.000000e+00> : vector<32x256xf32>
    %30 = tpu.matmul %7, %29, %cst_16 {dimension_numbers = #tpu.dot_dimension_numbers<[1], [0], [0], [1], [0, 0, 1, 1], [], []>} : vector<32x32xf32>, vector<32x256xf32>, vector<32x256xf32> -> vector<32x256xf32>
    %31 = arith.addf %30, %27 : vector<32x256xf32>
    %cst_17 = arith.constant 0.000000e+00 : f32
    %32 = vector.broadcast %cst_17 : f32 to vector<32x256xf32>
    %33 = arith.maximumf %31, %32 : vector<32x256xf32>
    %c0_18 = arith.constant 0 : index
    %c0_19 = arith.constant 0 : index
    %34 = vector.load %arg7[%c0_18, %c0_19] : memref<48x176xf32, #tpu.memory_space<vmem>>, vector<48x176xf32>
    %c0_20 = arith.constant 0 : index
    %c0_21 = arith.constant 0 : index
    %35 = vector.load %arg8[%c0_20, %c0_21] : memref<32x32xf32, #tpu.memory_space<vmem>>, vector<32x32xf32>
    %cst_22 = arith.constant dense<0.000000e+00> : vector<32x80xf32>
    %36 = tpu.matmul %33, %0, %cst_22 {dimension_numbers = #tpu.dot_dimension_numbers<[1], [0], [0], [1], [0, 0, 1, 1], [], []>} : vector<32x256xf32>, vector<256x80xf32>, vector<32x80xf32> -> vector<32x80xf32>
    %37 = vector.extract_strided_slice %36 {offsets = [0, 0], sizes = [16, 80], strides = [1, 1]} : vector<32x80xf32> to vector<16x80xf32>
    %38 = vector.extract_strided_slice %37 {offsets = [0, 0], sizes = [16, 16], strides = [1, 1]} : vector<16x80xf32> to vector<16x16xf32>
    %39 = vector.extract_strided_slice %37 {offsets = [0, 16], sizes = [16, 16], strides = [1, 1]} : vector<16x80xf32> to vector<16x16xf32>
    %40 = vector.extract_strided_slice %37 {offsets = [0, 32], sizes = [16, 16], strides = [1, 1]} : vector<16x80xf32> to vector<16x16xf32>
    %41 = vector.extract_strided_slice %37 {offsets = [0, 48], sizes = [16, 16], strides = [1, 1]} : vector<16x80xf32> to vector<16x16xf32>
    %42 = vector.extract_strided_slice %37 {offsets = [0, 64], sizes = [16, 16], strides = [1, 1]} : vector<16x80xf32> to vector<16x16xf32>
    %43 = vector.extract_strided_slice %36 {offsets = [16, 0], sizes = [16, 80], strides = [1, 1]} : vector<32x80xf32> to vector<16x80xf32>
    %44 = vector.extract_strided_slice %43 {offsets = [0, 0], sizes = [16, 16], strides = [1, 1]} : vector<16x80xf32> to vector<16x16xf32>
    %45 = vector.extract_strided_slice %43 {offsets = [0, 16], sizes = [16, 16], strides = [1, 1]} : vector<16x80xf32> to vector<16x16xf32>
    %46 = vector.extract_strided_slice %43 {offsets = [0, 32], sizes = [16, 16], strides = [1, 1]} : vector<16x80xf32> to vector<16x16xf32>
    %47 = vector.extract_strided_slice %43 {offsets = [0, 48], sizes = [16, 16], strides = [1, 1]} : vector<16x80xf32> to vector<16x16xf32>
    %48 = vector.extract_strided_slice %43 {offsets = [0, 64], sizes = [16, 16], strides = [1, 1]} : vector<16x80xf32> to vector<16x16xf32>
    %49 = tpu.concatenate %38, %39, %40, %41, %42, %3, %44, %45, %46, %47, %48, %3 in 0 : vector<16x16xf32>, vector<16x16xf32>, vector<16x16xf32>, vector<16x16xf32>, vector<16x16xf32>, vector<8x16xf32>, vector<16x16xf32>, vector<16x16xf32>, vector<16x16xf32>, vector<16x16xf32>, vector<16x16xf32>, vector<8x16xf32> -> vector<176x16xf32>
    %cst_23 = arith.constant dense<0.000000e+00> : vector<48x16xf32>
    %50 = tpu.matmul %34, %49, %cst_23 {dimension_numbers = #tpu.dot_dimension_numbers<[1], [0], [0], [1], [0, 0, 1, 1], [], []>} : vector<48x176xf32>, vector<176x16xf32>, vector<48x16xf32> -> vector<48x16xf32>
    %51 = vector.extract_strided_slice %50 {offsets = [0, 0], sizes = [16, 16], strides = [1, 1]} : vector<48x16xf32> to vector<16x16xf32>
    %52 = vector.extract_strided_slice %50 {offsets = [16, 0], sizes = [16, 16], strides = [1, 1]} : vector<48x16xf32> to vector<16x16xf32>
    %53 = vector.extract_strided_slice %50 {offsets = [32, 0], sizes = [16, 16], strides = [1, 1]} : vector<48x16xf32> to vector<16x16xf32>
    %54 = tpu.concatenate %51, %52, %53 in 1 : vector<16x16xf32>, vector<16x16xf32>, vector<16x16xf32> -> vector<16x48xf32>
    %cst_24 = arith.constant dense<0.000000e+00> : vector<16x256xf32>
    %55 = tpu.matmul %54, %1, %cst_24 {dimension_numbers = #tpu.dot_dimension_numbers<[1], [0], [0], [1], [0, 0, 1, 1], [], []>} : vector<16x48xf32>, vector<48x256xf32>, vector<16x256xf32> -> vector<16x256xf32>
    %cst_25 = arith.constant dense<0.000000e+00> : vector<32x256xf32>
    %56 = tpu.matmul %35, %33, %cst_25 {dimension_numbers = #tpu.dot_dimension_numbers<[1], [0], [0], [1], [0, 0, 1, 1], [], []>} : vector<32x32xf32>, vector<32x256xf32>, vector<32x256xf32> -> vector<32x256xf32>
    %57 = vector.extract_strided_slice %56 {offsets = [0, 0], sizes = [16, 256], strides = [1, 1]} : vector<32x256xf32> to vector<16x256xf32>
    %58 = vector.extract_strided_slice %56 {offsets = [16, 0], sizes = [16, 256], strides = [1, 1]} : vector<32x256xf32> to vector<16x256xf32>
    %cst_26 = arith.constant dense<0.000000e+00> : vector<16x256xf32>
    %59 = tpu.matmul %58, %2, %cst_26 {dimension_numbers = #tpu.dot_dimension_numbers<[1], [0], [0], [1], [0, 0, 1, 1], [], []>} : vector<16x256xf32>, vector<256x256xf32>, vector<16x256xf32> -> vector<16x256xf32>
    %60 = arith.addf %57, %59 : vector<16x256xf32>
    %61 = arith.addf %60, %55 : vector<16x256xf32>
    %cst_27 = arith.constant 0.000000e+00 : f32
    %62 = vector.broadcast %cst_27 : f32 to vector<16x256xf32>
    %63 = arith.maximumf %61, %62 : vector<16x256xf32>
    %64 = vector.shape_cast %63 : vector<16x256xf32> to vector<2x8x256xf32>
    %c0_28 = arith.constant 0 : index
    %c0_29 = arith.constant 0 : index
    %c0_30 = arith.constant 0 : index
    %65 = vector.load %arg9[%c0_28, %c0_29, %c0_30] : memref<2x8x256xf32, #tpu.memory_space<vmem>>, vector<2x8x256xf32>
    tpu.vector_store %arg9[%c0_28, %c0_29, %c0_30], %64 {strides = array<i32>} : memref<2x8x256xf32, #tpu.memory_space<vmem>>, vector<2x8x256xf32>,
    return
  }
  func.func @transform_0(%arg0: i32) -> (i32, i32, i32) {
    %c0_i32 = arith.constant 0 : i32
    %c0_i32_0 = arith.constant 0 : i32
    %c0_i32_1 = arith.constant 0 : i32
    return %arg0, %c0_i32, %c0_i32_0 : i32, i32, i32
  }
  func.func @transform_1(%arg0: i32) -> (i32, i32) {
    %c0_i32 = arith.constant 0 : i32
    %c0_i32_0 = arith.constant 0 : i32
    %c0_i32_1 = arith.constant 0 : i32
    return %c0_i32, %c0_i32_0 : i32, i32
  }
  func.func @transform_2(%arg0: i32) -> (i32, i32) {
    %c0_i32 = arith.constant 0 : i32
    %c0_i32_0 = arith.constant 0 : i32
    %c0_i32_1 = arith.constant 0 : i32
    return %c0_i32, %c0_i32_0 : i32, i32
  }
  func.func @transform_3(%arg0: i32) -> (i32, i32) {
    %c0_i32 = arith.constant 0 : i32
    %c0_i32_0 = arith.constant 0 : i32
    %c0_i32_1 = arith.constant 0 : i32
    return %c0_i32, %c0_i32_0 : i32, i32
  }
  func.func @transform_4(%arg0: i32) -> (i32, i32) {
    %c0_i32 = arith.constant 0 : i32
    %c0_i32_0 = arith.constant 0 : i32
    %c0_i32_1 = arith.constant 0 : i32
    return %c0_i32, %c0_i32_0 : i32, i32
  }
  func.func @transform_5(%arg0: i32) -> (i32, i32) {
    %c0_i32 = arith.constant 0 : i32
    %c0_i32_0 = arith.constant 0 : i32
    %c0_i32_1 = arith.constant 0 : i32
    return %c0_i32, %c0_i32_0 : i32, i32
  }
  func.func @transform_6(%arg0: i32) -> (i32, i32) {
    %c0_i32 = arith.constant 0 : i32
    %c0_i32_0 = arith.constant 0 : i32
    %c0_i32_1 = arith.constant 0 : i32
    return %c0_i32, %c0_i32_0 : i32, i32
  }
  func.func @transform_7(%arg0: i32) -> (i32, i32) {
    %c0_i32 = arith.constant 0 : i32
    %c0_i32_0 = arith.constant 0 : i32
    %c0_i32_1 = arith.constant 0 : i32
    return %c0_i32, %c0_i32_0 : i32, i32
  }
  func.func @transform_8(%arg0: i32) -> (i32, i32, i32) {
    %c0_i32 = arith.constant 0 : i32
    %c0_i32_0 = arith.constant 0 : i32
    %c0_i32_1 = arith.constant 0 : i32
    return %arg0, %c0_i32, %c0_i32_0 : i32, i32, i32
  }
}

</mosaic_0001>

<llo_original>
// kernel: _lambda_.1
$region0: #{_lambda_.1}
  #allocation0 [shape = 'u32[]', space=smem, size = 0x4, offset = 0x4, fixed_abs, tag = 'smem constant byte address 0x4 - core index']
  #allocation1 [shape = 'u32[72,128]{1,0:T(1,128)}', space=vmem, size = 0x9000, scoped, tag = 'internal scratch']
  %s0 = inlined_call_operand.vmem [shape: f32[2,8,256], index: 0, kind: input, shape index: {}]
  %s1 = inlined_call_operand.vmem [shape: f32[256,80], index: 1, kind: input, shape index: {}]
  %s2 = inlined_call_operand.vmem [shape: f32[48,256], index: 2, kind: input, shape index: {}]
  %s3 = inlined_call_operand.vmem [shape: f32[256,256], index: 3, kind: input, shape index: {}]
  %s4 = inlined_call_operand.vmem [shape: f32[96,96], index: 4, kind: input, shape index: {}]
  %s5 = inlined_call_operand.vmem [shape: f32[32,32], index: 5, kind: input, shape index: {}]
  %s6 = inlined_call_operand.vmem [shape: f32[48,176], index: 6, kind: input, shape index: {}]
  %s7 = inlined_call_operand.vmem [shape: f32[32,32], index: 7, kind: input, shape index: {}]
  %s8 = inlined_call_operand.vmem [shape: f32[2,8,256], index: 8, kind: output, shape index: {}]
  %s9 = sld [smem:[#allocation0]]
  $region42: #{_lambda_.1} parent=0
    _
  %s11 = ssub.s32 1, %s9
  %s12 = scalar_select 0, %s11, %s9
  // Predicated region
  $region2: #{_lambda_.1} parent=0 // pred_check
    _
  $region3: #{_lambda_.1} parent=0 // pred_check_branch
    %14 = sbr.rel (0) target = $region5
  $region4: #{_lambda_.1} parent=0 // pred_region
    _
  $region5: #{_lambda_.1} parent=0 // pred_fallthru
    _
  // Predicated region
  $region6: #{_lambda_.1} parent=0 // pred_check
    _
  $region7: #{_lambda_.1} parent=0 // pred_check_branch
    %16 = sbr.rel (0) target = $region9
  $region8: #{_lambda_.1} parent=0 // pred_region
    _
  $region9: #{_lambda_.1} parent=0 // pred_fallthru
    _
  // Predicated region
  $region10: #{_lambda_.1} parent=0 // pred_check
    _
  $region11: #{_lambda_.1} parent=0 // pred_check_branch
    %18 = sbr.rel (0) target = $region13
  $region12: #{_lambda_.1} parent=0 // pred_region
    _
  $region13: #{_lambda_.1} parent=0 // pred_fallthru
    _
  // Predicated region
  $region14: #{_lambda_.1} parent=0 // pred_check
    _
  $region15: #{_lambda_.1} parent=0 // pred_check_branch
    %20 = sbr.rel (0) target = $region17
  $region16: #{_lambda_.1} parent=0 // pred_region
    _
  $region17: #{_lambda_.1} parent=0 // pred_fallthru
    _
  // Predicated region
  $region18: #{_lambda_.1} parent=0 // pred_check
    _
  $region19: #{_lambda_.1} parent=0 // pred_check_branch
    %22 = sbr.rel (0) target = $region21
  $region20: #{_lambda_.1} parent=0 // pred_region
    _
  $region21: #{_lambda_.1} parent=0 // pred_fallthru
    _
  // Predicated region
  $region22: #{_lambda_.1} parent=0 // pred_check
    _
  $region23: #{_lambda_.1} parent=0 // pred_check_branch
    %24 = sbr.rel (0) target = $region25
  $region24: #{_lambda_.1} parent=0 // pred_region
    _
  $region25: #{_lambda_.1} parent=0 // pred_fallthru
    _
  // Predicated region
  $region26: #{_lambda_.1} parent=0 // pred_check
    _
  $region27: #{_lambda_.1} parent=0 // pred_check_branch
    %26 = sbr.rel (0) target = $region29
  $region28: #{_lambda_.1} parent=0 // pred_region
    _
  $region29: #{_lambda_.1} parent=0 // pred_fallthru
    _
  // Predicated region
  $region30: #{_lambda_.1} parent=0 // pred_check
    _
  $region31: #{_lambda_.1} parent=0 // pred_check_branch
    %28 = sbr.rel (0) target = $region33
  $region32: #{_lambda_.1} parent=0 // pred_region
    _
  $region33: #{_lambda_.1} parent=0 // pred_fallthru
    _
  %v29 = vld [vmem:[%s1] sm:$0xff]
  %v30 = vld [vmem:[%s1 + $0x8] sm:$0xff]
  %v31 = vld [vmem:[%s1 + $0x10] sm:$0xff]
  %v32 = vld [vmem:[%s1 + $0x18] sm:$0xff]
  %v33 = vld [vmem:[%s1 + $0x20] sm:$0xff]
  %v34 = vld [vmem:[%s1 + $0x28] sm:$0xff]
  %v35 = vld [vmem:[%s1 + $0x30] sm:$0xff]
  %v36 = vld [vmem:[%s1 + $0x38] sm:$0xff]
  %v37 = vld [vmem:[%s1 + $0x40] sm:$0xff]
  %v38 = vld [vmem:[%s1 + $0x48] sm:$0xff]
  %v39 = vld [vmem:[%s1 + $0x50] sm:$0xff]
  %v40 = vld [vmem:[%s1 + $0x58] sm:$0xff]
  %v41 = vld [vmem:[%s1 + $0x60] sm:$0xff]
  %v42 = vld [vmem:[%s1 + $0x68] sm:$0xff]
  %v43 = vld [vmem:[%s1 + $0x70] sm:$0xff]
  %v44 = vld [vmem:[%s1 + $0x78] sm:$0xff]
  %v45 = vld [vmem:[%s1 + $0x80] sm:$0xff]
  %v46 = vld [vmem:[%s1 + $0x88] sm:$0xff]
  %v47 = vld [vmem:[%s1 + $0x90] sm:$0xff]
  %v48 = vld [vmem:[%s1 + $0x98] sm:$0xff]
  %v49 = vld [vmem:[%s1 + $0xa0] sm:$0xff]
  %v50 = vld [vmem:[%s1 + $0xa8] sm:$0xff]
  %v51 = vld [vmem:[%s1 + $0xb0] sm:$0xff]
  %v52 = vld [vmem:[%s1 + $0xb8] sm:$0xff]
  %v53 = vld [vmem:[%s1 + $0xc0] sm:$0xff]
  %v54 = vld [vmem:[%s1 + $0xc8] sm:$0xff]
  %v55 = vld [vmem:[%s1 + $0xd0] sm:$0xff]
  %v56 = vld [vmem:[%s1 + $0xd8] sm:$0xff]
  %v57 = vld [vmem:[%s1 + $0xe0] sm:$0xff]
  %v58 = vld [vmem:[%s1 + $0xe8] sm:$0xff]
  %v59 = vld [vmem:[%s1 + $0xf0] sm:$0xff]
  %v60 = vld [vmem:[%s1 + $0xf8] sm:$0xff]
  %v61 = vld [vmem:[%s2] sm:$0xff]
  %v62 = vld [vmem:[%s2 + $0x8] sm:$0xff]
  %v63 = vld [vmem:[%s2 + $0x10] sm:$0xff]
  %v64 = vld [vmem:[%s2 + $0x18] sm:$0xff]
  %v65 = vld [vmem:[%s2 + $0x20] sm:$0xff]
  %v66 = vld [vmem:[%s2 + $0x28] sm:$0xff]
  %v67 = vld [vmem:[%s2 + $0x30] sm:$0xff]
  %v68 = vld [vmem:[%s2 + $0x38] sm:$0xff]
  %v69 = vld [vmem:[%s2 + $0x40] sm:$0xff]
  %v70 = vld [vmem:[%s2 + $0x48] sm:$0xff]
  %v71 = vld [vmem:[%s2 + $0x50] sm:$0xff]
  %v72 = vld [vmem:[%s2 + $0x58] sm:$0xff]
  %v73 = vld [vmem:[%s3] sm:$0xff]
  %v74 = vld [vmem:[%s3 + $0x8] sm:$0xff]
  %v75 = vld [vmem:[%s3 + $0x10] sm:$0xff]
  %v76 = vld [vmem:[%s3 + $0x18] sm:$0xff]
  %v77 = vld [vmem:[%s3 + $0x20] sm:$0xff]
  %v78 = vld [vmem:[%s3 + $0x28] sm:$0xff]
  %v79 = vld [vmem:[%s3 + $0x30] sm:$0xff]
  %v80 = vld [vmem:[%s3 + $0x38] sm:$0xff]
  %v81 = vld [vmem:[%s3 + $0x40] sm:$0xff]
  %v82 = vld [vmem:[%s3 + $0x48] sm:$0xff]
  %v83 = vld [vmem:[%s3 + $0x50] sm:$0xff]
  %v84 = vld [vmem:[%s3 + $0x58] sm:$0xff]
  %v85 = vld [vmem:[%s3 + $0x60] sm:$0xff]
  %v86 = vld [vmem:[%s3 + $0x68] sm:$0xff]
  %v87 = vld [vmem:[%s3 + $0x70] sm:$0xff]
  %v88 = vld [vmem:[%s3 + $0x78] sm:$0xff]
  %v89 = vld [vmem:[%s3 + $0x80] sm:$0xff]
  %v90 = vld [vmem:[%s3 + $0x88] sm:$0xff]
  %v91 = vld [vmem:[%s3 + $0x90] sm:$0xff]
  %v92 = vld [vmem:[%s3 + $0x98] sm:$0xff]
  %v93 = vld [vmem:[%s3 + $0xa0] sm:$0xff]
  %v94 = vld [vmem:[%s3 + $0xa8] sm:$0xff]
  %v95 = vld [vmem:[%s3 + $0xb0] sm:$0xff]
  %v96 = vld [vmem:[%s3 + $0xb8] sm:$0xff]
  %v97 = vld [vmem:[%s3 + $0xc0] sm:$0xff]
  %v98 = vld [vmem:[%s3 + $0xc8] sm:$0xff]
  %v99 = vld [vmem:[%s3 + $0xd0] sm:$0xff]
  %v100 = vld [vmem:[%s3 + $0xd8] sm:$0xff]
  %v101 = vld [vmem:[%s3 + $0xe0] sm:$0xff]
  %v102 = vld [vmem:[%s3 + $0xe8] sm:$0xff]
  %v103 = vld [vmem:[%s3 + $0xf0] sm:$0xff]
  %v104 = vld [vmem:[%s3 + $0xf8] sm:$0xff]
  %v105 = vld [vmem:[%s3 + $0x100] sm:$0xff]
  %v106 = vld [vmem:[%s3 + $0x108] sm:$0xff]
  %v107 = vld [vmem:[%s3 + $0x110] sm:$0xff]
  %v108 = vld [vmem:[%s3 + $0x118] sm:$0xff]
  %v109 = vld [vmem:[%s3 + $0x120] sm:$0xff]
  %v110 = vld [vmem:[%s3 + $0x128] sm:$0xff]
  %v111 = vld [vmem:[%s3 + $0x130] sm:$0xff]
  %v112 = vld [vmem:[%s3 + $0x138] sm:$0xff]
  %v113 = vld [vmem:[%s3 + $0x140] sm:$0xff]
  %v114 = vld [vmem:[%s3 + $0x148] sm:$0xff]
  %v115 = vld [vmem:[%s3 + $0x150] sm:$0xff]
  %v116 = vld [vmem:[%s3 + $0x158] sm:$0xff]
  %v117 = vld [vmem:[%s3 + $0x160] sm:$0xff]
  %v118 = vld [vmem:[%s3 + $0x168] sm:$0xff]
  %v119 = vld [vmem:[%s3 + $0x170] sm:$0xff]
  %v120 = vld [vmem:[%s3 + $0x178] sm:$0xff]
  %v121 = vld [vmem:[%s3 + $0x180] sm:$0xff]
  %v122 = vld [vmem:[%s3 + $0x188] sm:$0xff]
  %v123 = vld [vmem:[%s3 + $0x190] sm:$0xff]
  %v124 = vld [vmem:[%s3 + $0x198] sm:$0xff]
  %v125 = vld [vmem:[%s3 + $0x1a0] sm:$0xff]
  %v126 = vld [vmem:[%s3 + $0x1a8] sm:$0xff]
  %v127 = vld [vmem:[%s3 + $0x1b0] sm:$0xff]
  %v128 = vld [vmem:[%s3 + $0x1b8] sm:$0xff]
  %v129 = vld [vmem:[%s3 + $0x1c0] sm:$0xff]
  %v130 = vld [vmem:[%s3 + $0x1c8] sm:$0xff]
  %v131 = vld [vmem:[%s3 + $0x1d0] sm:$0xff]
  %v132 = vld [vmem:[%s3 + $0x1d8] sm:$0xff]
  %v133 = vld [vmem:[%s3 + $0x1e0] sm:$0xff]
  %v134 = vld [vmem:[%s3 + $0x1e8] sm:$0xff]
  %v135 = vld [vmem:[%s3 + $0x1f0] sm:$0xff]
  %v136 = vld [vmem:[%s3 + $0x1f8] sm:$0xff]
  %v137 = vld [vmem:[%s0] sm:$0xff]
  %v138 = vld [vmem:[%s0 + $0x8] sm:$0xff]
  %v139 = vld [vmem:[%s0 + $0x10] sm:$0xff]
  %v140 = vld [vmem:[%s0 + $0x18] sm:$0xff]
  %v141 = vld [vmem:[%s4] sm:$0xff]
  %v142 = vld [vmem:[%s4 + $0x8] sm:$0xff]
  %v143 = vld [vmem:[%s4 + $0x10] sm:$0xff]
  %v144 = vld [vmem:[%s4 + $0x18] sm:$0xff]
  %v145 = vld [vmem:[%s4 + $0x20] sm:$0xff]
  %v146 = vld [vmem:[%s4 + $0x28] sm:$0xff]
  %v147 = vld [vmem:[%s4 + $0x30] sm:$0xff]
  %v148 = vld [vmem:[%s4 + $0x38] sm:$0xff]
  %v149 = vld [vmem:[%s4 + $0x40] sm:$0xff]
  %v150 = vld [vmem:[%s4 + $0x48] sm:$0xff]
  %v151 = vld [vmem:[%s4 + $0x50] sm:$0xff]
  %v152 = vld [vmem:[%s4 + $0x58] sm:$0xff]
  %v153 = vld [vmem:[%s5] sm:$0xff]
  %v154 = vld [vmem:[%s5 + $0x8] sm:$0xff]
  %v155 = vld [vmem:[%s5 + $0x10] sm:$0xff]
  %v156 = vld [vmem:[%s5 + $0x18] sm:$0xff]
  %157 = vmatpush.msra.mxu0 %v44
  %158 = vmatpush.msra.mxu0 %v43
  %159 = vmatpush.msra.mxu0 %v42
  %160 = vmatpush.msra.mxu0 %v41
  %161 = vmatpush.msra.mxu0 %v40
  %162 = vmatpush.msra.mxu0 %v39
  %163 = vmatpush.msra.mxu0 %v38
  %164 = vmatpush.msra.mxu0 %v37
  %165 = vmatpush.msra.mxu0 %v36
  %166 = vmatpush.msra.mxu0 %v35
  %167 = vmatpush.msra.mxu0 %v34
  %168 = vmatpush.msra.mxu0 %v33
  %169 = vmatpush.msra.mxu0 %v32
  %170 = vmatpush.msra.mxu0 %v31
  %171 = vmatpush.msra.mxu0 %v30
  %172 = vmatpush.msra.mxu0 %v29
  %173 = vmatmul.f32.gmra.mxu0 %v137
  %v174 = vpop.f32.mrf.mxu0
  %v175 = vadd.f32 0.0, %v174
  %176 = vmatmul.f32.gmra.mxu0 %v139
  %v177 = vpop.f32.mrf.mxu0
  %v178 = vadd.f32 0.0, %v177
  %179 = vdwg.mxu0
  %180 = vmatpush.msra.mxu0 %v60
  %181 = vmatpush.msra.mxu0 %v59
  %182 = vmatpush.msra.mxu0 %v58
  %183 = vmatpush.msra.mxu0 %v57
  %184 = vmatpush.msra.mxu0 %v56
  %185 = vmatpush.msra.mxu0 %v55
  %186 = vmatpush.msra.mxu0 %v54
  %187 = vmatpush.msra.mxu0 %v53
  %188 = vmatpush.msra.mxu0 %v52
  %189 = vmatpush.msra.mxu0 %v51
  %190 = vmatpush.msra.mxu0 %v50
  %191 = vmatpush.msra.mxu0 %v49
  %192 = vmatpush.msra.mxu0 %v48
  %193 = vmatpush.msra.mxu0 %v47
  %194 = vmatpush.msra.mxu0 %v46
  %195 = vmatpush.msra.mxu0 %v45
  %196 = vmatmul.f32.gmra.mxu0 %v138
  %v197 = vpop.f32.mrf.mxu0
  %v198 = vadd.f32 %v175, %v197
  %199 = vmatmul.f32.gmra.mxu0 %v140
  %v200 = vpop.f32.mrf.mxu0
  %v201 = vadd.f32 %v178, %v200
  %202 = vdwg.mxu0
  %204 = vrot.lane.b32.xlu0 %v198, 112
  %v205 = vpop.permute.xlu0 %204
  %207 = vrot.lane.b32.xlu0 %v198, 96
  %v208 = vpop.permute.xlu0 %207
  %210 = vrot.lane.b32.xlu0 %v198, 80
  %v211 = vpop.permute.xlu0 %210
  %213 = vrot.lane.b32.xlu0 %v198, 64
  %v214 = vpop.permute.xlu0 %213
  %217 = vrot.lane.b32.xlu0 %v201, 112
  %v218 = vpop.permute.xlu0 %217
  %220 = vrot.lane.b32.xlu0 %v201, 96
  %v221 = vpop.permute.xlu0 %220
  %223 = vrot.lane.b32.xlu0 %v201, 80
  %v224 = vpop.permute.xlu0 %223
  %226 = vrot.lane.b32.xlu0 %v201, 64
  %v227 = vpop.permute.xlu0 %226
  %vm229 = vcmask 785408
  %v231 = vsel %vm229, %v141, 0
  %v234 = vsel %vm229, %v142, 0
  %v237 = vsel %vm229, %v143, 0
  %v240 = vsel %vm229, %v144, 0
  %v243 = vsel %vm229, %v145, 0
  %v246 = vsel %vm229, %v146, 0
  %v249 = vsel %vm229, %v147, 0
  %v252 = vsel %vm229, %v148, 0
  %v255 = vsel %vm229, %v149, 0
  %v258 = vsel %vm229, %v150, 0
  %v261 = vsel %vm229, %v151, 0
  %v264 = vsel %vm229, %v152, 0
  %266 = vmatpush.msra.mxu0 0.0
  %267 = vmatpush.msra.mxu0 0.0
  %268 = vmatpush.msra.mxu0 0.0
  %269 = vmatpush.msra.mxu0 0.0
  %270 = vmatpush.msra.mxu0 1.0
  %271 = vmatpush.msra.mxu0 %v227
  %272 = vmatpush.msra.mxu0 %v224
  %273 = vmatpush.msra.mxu0 %v221
  %274 = vmatpush.msra.mxu0 %v218
  %275 = vmatpush.msra.mxu0 %v201
  %276 = vmatpush.msra.mxu0 1.0
  %277 = vmatpush.msra.mxu0 %v214
  %278 = vmatpush.msra.mxu0 %v211
  %279 = vmatpush.msra.mxu0 %v208
  %280 = vmatpush.msra.mxu0 %v205
  %281 = vmatpush.msra.mxu0 %v198
  %282 = vmatmul.f32.gmra.mxu0 %v231
  %v283 = vpop.f32.mrf.mxu0
  %v284 = vadd.f32 0.0, %v283
  %285 = vmatmul.f32.gmra.mxu0 %v234
  %v286 = vpop.f32.mrf.mxu0
  %v287 = vadd.f32 0.0, %v286
  %288 = vmatmul.f32.gmra.mxu0 %v237
  %v289 = vpop.f32.mrf.mxu0
  %v290 = vadd.f32 0.0, %v289
  %291 = vmatmul.f32.gmra.mxu0 %v240
  %v292 = vpop.f32.mrf.mxu0
  %v293 = vadd.f32 0.0, %v292
  %294 = vmatmul.f32.gmra.mxu0 %v243
  %v295 = vpop.f32.mrf.mxu0
  %v296 = vadd.f32 0.0, %v295
  %297 = vmatmul.f32.gmra.mxu0 %v246
  %v298 = vpop.f32.mrf.mxu0
  %v299 = vadd.f32 0.0, %v298
  %300 = vmatmul.f32.gmra.mxu0 %v249
  %v301 = vpop.f32.mrf.mxu0
  %v302 = vadd.f32 0.0, %v301
  %303 = vmatmul.f32.gmra.mxu0 %v252
  %v304 = vpop.f32.mrf.mxu0
  %v305 = vadd.f32 0.0, %v304
  %306 = vmatmul.f32.gmra.mxu0 %v255
  %v307 = vpop.f32.mrf.mxu0
  %v308 = vadd.f32 0.0, %v307
  %309 = vmatmul.f32.gmra.mxu0 %v258
  %v310 = vpop.f32.mrf.mxu0
  %v311 = vadd.f32 0.0, %v310
  %312 = vmatmul.f32.gmra.mxu0 %v261
  %v313 = vpop.f32.mrf.mxu0
  %v314 = vadd.f32 0.0, %v313
  %315 = vmatmul.f32.gmra.mxu0 %v264
  %v316 = vpop.f32.mrf.mxu0
  %v317 = vadd.f32 0.0, %v316
  %318 = vdwg.mxu0
  %323 = vrot.lane.b32.xlu0 %v296, 16
  %v324 = vpop.permute.xlu0 %323
  %325 = vrot.lane.b32.xlu0 %v299, 16
  %v326 = vpop.permute.xlu0 %325
  %327 = vrot.lane.b32.xlu0 %v302, 16
  %v328 = vpop.permute.xlu0 %327
  %329 = vrot.lane.b32.xlu0 %v305, 16
  %v330 = vpop.permute.xlu0 %329
  %339 = vrot.lane.b32.xlu0 %v308, 32
  %v340 = vpop.permute.xlu0 %339
  %341 = vrot.lane.b32.xlu0 %v311, 32
  %v342 = vpop.permute.xlu0 %341
  %343 = vrot.lane.b32.xlu0 %v314, 32
  %v344 = vpop.permute.xlu0 %343
  %345 = vrot.lane.b32.xlu0 %v317, 32
  %v346 = vpop.permute.xlu0 %345
  %vm351 = vcmask 130048
  %v352 = vsel %vm351, %v284, %v324
  %v353 = vsel %vm351, %v287, %v326
  %v354 = vsel %vm351, %v290, %v328
  %v355 = vsel %vm351, %v293, %v330
  %vm356 = vcmask 261120
  %v357 = vsel %vm356, %v352, %v340
  %v358 = vsel %vm356, %v353, %v342
  %v359 = vsel %vm356, %v354, %v344
  %v360 = vsel %vm356, %v355, %v346
  %vm361 = vcmask 392192
  %v363 = vsel %vm361, %v357, 0
  %v366 = vsel %vm361, %v358, 0
  %v369 = vsel %vm361, %v359, 0
  %v372 = vsel %vm361, %v360, 0
  %374 = vmatpush.msra.mxu0 0.0
  %375 = vmatpush.msra.mxu0 0.0
  %376 = vmatpush.msra.mxu0 0.0
  %377 = vmatpush.msra.mxu0 0.0
  %378 = vmatpush.msra.mxu0 0.0
  %379 = vmatpush.msra.mxu0 0.0
  %380 = vmatpush.msra.mxu0 0.0
  %381 = vmatpush.msra.mxu0 0.0
  %382 = vmatpush.msra.mxu0 0.0
  %383 = vmatpush.msra.mxu0 0.0
  %384 = vmatpush.msra.mxu0 %v71
  %385 = vmatpush.msra.mxu0 %v69
  %386 = vmatpush.msra.mxu0 %v67
  %387 = vmatpush.msra.mxu0 %v65
  %388 = vmatpush.msra.mxu0 %v63
  %389 = vmatpush.msra.mxu0 %v61
  %390 = vmatmul.f32.gmra.mxu0 %v363
  %v391 = vpop.f32.mrf.mxu0
  %v392 = vadd.f32 0.0, %v391
  %393 = vmatmul.f32.gmra.mxu0 %v366
  %v394 = vpop.f32.mrf.mxu0
  %v395 = vadd.f32 0.0, %v394
  %396 = vmatmul.f32.gmra.mxu0 %v369
  %v397 = vpop.f32.mrf.mxu0
  %v398 = vadd.f32 0.0, %v397
  %399 = vmatmul.f32.gmra.mxu0 %v372
  %v400 = vpop.f32.mrf.mxu0
  %v401 = vadd.f32 0.0, %v400
  %402 = vdwg.mxu0
  %403 = vmatpush.msra.mxu0 0.0
  %404 = vmatpush.msra.mxu0 0.0
  %405 = vmatpush.msra.mxu0 0.0
  %406 = vmatpush.msra.mxu0 0.0
  %407 = vmatpush.msra.mxu0 0.0
  %408 = vmatpush.msra.mxu0 0.0
  %409 = vmatpush.msra.mxu0 0.0
  %410 = vmatpush.msra.mxu0 0.0
  %411 = vmatpush.msra.mxu0 0.0
  %412 = vmatpush.msra.mxu0 0.0
  %413 = vmatpush.msra.mxu0 %v72
  %414 = vmatpush.msra.mxu0 %v70
  %415 = vmatpush.msra.mxu0 %v68
  %416 = vmatpush.msra.mxu0 %v66
  %417 = vmatpush.msra.mxu0 %v64
  %418 = vmatpush.msra.mxu0 %v62
  %419 = vmatmul.f32.gmra.mxu0 %v363
  %v420 = vpop.f32.mrf.mxu0
  %v421 = vadd.f32 0.0, %v420
  %422 = vmatmul.f32.gmra.mxu0 %v366
  %v423 = vpop.f32.mrf.mxu0
  %v424 = vadd.f32 0.0, %v423
  %425 = vmatmul.f32.gmra.mxu0 %v369
  %v426 = vpop.f32.mrf.mxu0
  %v427 = vadd.f32 0.0, %v426
  %428 = vmatmul.f32.gmra.mxu0 %v372
  %v429 = vpop.f32.mrf.mxu0
  %v430 = vadd.f32 0.0, %v429
  %431 = vdwg.mxu0
  %432 = vmatpush.msra.mxu0 %v103
  %433 = vmatpush.msra.mxu0 %v101
  %434 = vmatpush.msra.mxu0 %v99
  %435 = vmatpush.msra.mxu0 %v97
  %436 = vmatpush.msra.mxu0 %v95
  %437 = vmatpush.msra.mxu0 %v93
  %438 = vmatpush.msra.mxu0 %v91
  %439 = vmatpush.msra.mxu0 %v89
  %440 = vmatpush.msra.mxu0 %v87
  %441 = vmatpush.msra.mxu0 %v85
  %442 = vmatpush.msra.mxu0 %v83
  %443 = vmatpush.msra.mxu0 %v81
  %444 = vmatpush.msra.mxu0 %v79
  %445 = vmatpush.msra.mxu0 %v77
  %446 = vmatpush.msra.mxu0 %v75
  %447 = vmatpush.msra.mxu0 %v73
  %448 = vmatmul.f32.gmra.mxu0 %v137
  %v449 = vpop.f32.mrf.mxu0
  %v450 = vadd.f32 0.0, %v449
  %451 = vmatmul.f32.gmra.mxu0 %v139
  %v452 = vpop.f32.mrf.mxu0
  %v453 = vadd.f32 0.0, %v452
  %454 = vdwg.mxu0
  %455 = vmatpush.msra.mxu0 %v135
  %456 = vmatpush.msra.mxu0 %v133
  %457 = vmatpush.msra.mxu0 %v131
  %458 = vmatpush.msra.mxu0 %v129
  %459 = vmatpush.msra.mxu0 %v127
  %460 = vmatpush.msra.mxu0 %v125
  %461 = vmatpush.msra.mxu0 %v123
  %462 = vmatpush.msra.mxu0 %v121
  %463 = vmatpush.msra.mxu0 %v119
  %464 = vmatpush.msra.mxu0 %v117
  %465 = vmatpush.msra.mxu0 %v115
  %466 = vmatpush.msra.mxu0 %v113
  %467 = vmatpush.msra.mxu0 %v111
  %468 = vmatpush.msra.mxu0 %v109
  %469 = vmatpush.msra.mxu0 %v107
  %470 = vmatpush.msra.mxu0 %v105
  %471 = vmatmul.f32.gmra.mxu0 %v138
  %v472 = vpop.f32.mrf.mxu0
  %v473 = vadd.f32 %v450, %v472
  %474 = vmatmul.f32.gmra.mxu0 %v140
  %v475 = vpop.f32.mrf.mxu0
  %v476 = vadd.f32 %v453, %v475
  %477 = vdwg.mxu0
  %478 = vmatpush.msra.mxu0 %v104
  %479 = vmatpush.msra.mxu0 %v102
  %480 = vmatpush.msra.mxu0 %v100
  %481 = vmatpush.msra.mxu0 %v98
  %482 = vmatpush.msra.mxu0 %v96
  %483 = vmatpush.msra.mxu0 %v94
  %484 = vmatpush.msra.mxu0 %v92
  %485 = vmatpush.msra.mxu0 %v90
  %486 = vmatpush.msra.mxu0 %v88
  %487 = vmatpush.msra.mxu0 %v86
  %488 = vmatpush.msra.mxu0 %v84
  %489 = vmatpush.msra.mxu0 %v82
  %490 = vmatpush.msra.mxu0 %v80
  %491 = vmatpush.msra.mxu0 %v78
  %492 = vmatpush.msra.mxu0 %v76
  %493 = vmatpush.msra.mxu0 %v74
  %494 = vmatmul.f32.gmra.mxu0 %v137
  %v495 = vpop.f32.mrf.mxu0
  %v496 = vadd.f32 0.0, %v495
  %497 = vmatmul.f32.gmra.mxu0 %v139
  %v498 = vpop.f32.mrf.mxu0
  %v499 = vadd.f32 0.0, %v498
  %500 = vdwg.mxu0
  %501 = vmatpush.msra.mxu0 %v136
  %502 = vmatpush.msra.mxu0 %v134
  %503 = vmatpush.msra.mxu0 %v132
  %504 = vmatpush.msra.mxu0 %v130
  %505 = vmatpush.msra.mxu0 %v128
  %506 = vmatpush.msra.mxu0 %v126
  %507 = vmatpush.msra.mxu0 %v124
  %508 = vmatpush.msra.mxu0 %v122
  %509 = vmatpush.msra.mxu0 %v120
  %510 = vmatpush.msra.mxu0 %v118
  %511 = vmatpush.msra.mxu0 %v116
  %512 = vmatpush.msra.mxu0 %v114
  %513 = vmatpush.msra.mxu0 %v112
  %514 = vmatpush.msra.mxu0 %v110
  %515 = vmatpush.msra.mxu0 %v108
  %516 = vmatpush.msra.mxu0 %v106
  %517 = vmatmul.f32.gmra.mxu0 %v138
  %v518 = vpop.f32.mrf.mxu0
  %v519 = vadd.f32 %v496, %v518
  %520 = vmatmul.f32.gmra.mxu0 %v140
  %v521 = vpop.f32.mrf.mxu0
  %v522 = vadd.f32 %v499, %v521
  %523 = vdwg.mxu0
  %v525 = vsel %vm356, %v153, 0
  %v528 = vsel %vm356, %v154, 0
  %v531 = vsel %vm356, %v155, 0
  %v534 = vsel %vm356, %v156, 0
  %536 = vmatpush.msra.mxu0 0.0
  %537 = vmatpush.msra.mxu0 0.0
  %538 = vmatpush.msra.mxu0 0.0
  %539 = vmatpush.msra.mxu0 0.0
  %540 = vmatpush.msra.mxu0 0.0
  %541 = vmatpush.msra.mxu0 0.0
  %542 = vmatpush.msra.mxu0 0.0
  %543 = vmatpush.msra.mxu0 0.0
  %544 = vmatpush.msra.mxu0 0.0
  %545 = vmatpush.msra.mxu0 0.0
  %546 = vmatpush.msra.mxu0 0.0
  %547 = vmatpush.msra.mxu0 0.0
  %548 = vmatpush.msra.mxu0 %v476
  %549 = vmatpush.msra.mxu0 %v473
  %550 = vmatpush.msra.mxu0 %v139
  %551 = vmatpush.msra.mxu0 %v137
  %552 = vmatmul.f32.gmra.mxu0 %v525
  %v553 = vpop.f32.mrf.mxu0
  %v554 = vadd.f32 %v392, %v553
  %555 = vmatmul.f32.gmra.mxu0 %v528
  %v556 = vpop.f32.mrf.mxu0
  %v557 = vadd.f32 %v395, %v556
  %558 = vmatmul.f32.gmra.mxu0 %v531
  %v559 = vpop.f32.mrf.mxu0
  %v560 = vadd.f32 %v398, %v559
  %561 = vmatmul.f32.gmra.mxu0 %v534
  %v562 = vpop.f32.mrf.mxu0
  %v563 = vadd.f32 %v401, %v562
  %564 = vdwg.mxu0
  %565 = vmatpush.msra.mxu0 0.0
  %566 = vmatpush.msra.mxu0 0.0
  %567 = vmatpush.msra.mxu0 0.0
  %568 = vmatpush.msra.mxu0 0.0
  %569 = vmatpush.msra.mxu0 0.0
  %570 = vmatpush.msra.mxu0 0.0
  %571 = vmatpush.msra.mxu0 0.0
  %572 = vmatpush.msra.mxu0 0.0
  %573 = vmatpush.msra.mxu0 0.0
  %574 = vmatpush.msra.mxu0 0.0
  %575 = vmatpush.msra.mxu0 0.0
  %576 = vmatpush.msra.mxu0 0.0
  %577 = vmatpush.msra.mxu0 %v522
  %578 = vmatpush.msra.mxu0 %v519
  %579 = vmatpush.msra.mxu0 %v140
  %580 = vmatpush.msra.mxu0 %v138
  %581 = vmatmul.f32.gmra.mxu0 %v525
  %v582 = vpop.f32.mrf.mxu0
  %v583 = vadd.f32 %v421, %v582
  %584 = vmatmul.f32.gmra.mxu0 %v528
  %v585 = vpop.f32.mrf.mxu0
  %v586 = vadd.f32 %v424, %v585
  %587 = vmatmul.f32.gmra.mxu0 %v531
  %v588 = vpop.f32.mrf.mxu0
  %v589 = vadd.f32 %v427, %v588
  %590 = vmatmul.f32.gmra.mxu0 %v534
  %v591 = vpop.f32.mrf.mxu0
  %v592 = vadd.f32 %v430, %v591
  %593 = vdwg.mxu0
  %v594 = vmax.f32 %v554, 0.0
  %v595 = vmax.f32 %v583, 0.0
  %v596 = vmax.f32 %v557, 0.0
  %v597 = vmax.f32 %v586, 0.0
  %v598 = vmax.f32 %v560, 0.0
  %v599 = vmax.f32 %v589, 0.0
  %v600 = vmax.f32 %v563, 0.0
  %v601 = vmax.f32 %v592, 0.0
  %v602 = vld [vmem:[%s6] sm:$0xff]
  %v603 = vld [vmem:[%s6 + $0x8] sm:$0xff]
  %v604 = vld [vmem:[%s6 + $0x10] sm:$0xff]
  %v605 = vld [vmem:[%s6 + $0x18] sm:$0xff]
  %v606 = vld [vmem:[%s6 + $0x20] sm:$0xff]
  %v607 = vld [vmem:[%s6 + $0x28] sm:$0xff]
  %v608 = vld [vmem:[%s6 + $0x30] sm:$0xff]
  %v609 = vld [vmem:[%s6 + $0x38] sm:$0xff]
  %v610 = vld [vmem:[%s6 + $0x40] sm:$0xff]
  %v611 = vld [vmem:[%s6 + $0x48] sm:$0xff]
  %v612 = vld [vmem:[%s6 + $0x50] sm:$0xff]
  %v613 = vld [vmem:[%s6 + $0x58] sm:$0xff]
  %v614 = vld [vmem:[%s7] sm:$0xff]
  %v615 = vld [vmem:[%s7 + $0x8] sm:$0xff]
  %v616 = vld [vmem:[%s7 + $0x10] sm:$0xff]
  %v617 = vld [vmem:[%s7 + $0x18] sm:$0xff]
  %618 = vmatpush.msra.mxu0 %v44
  %619 = vmatpush.msra.mxu0 %v43
  %620 = vmatpush.msra.mxu0 %v42
  %621 = vmatpush.msra.mxu0 %v41
  %622 = vmatpush.msra.mxu0 %v40
  %623 = vmatpush.msra.mxu0 %v39
  %624 = vmatpush.msra.mxu0 %v38
  %625 = vmatpush.msra.mxu0 %v37
  %626 = vmatpush.msra.mxu0 %v36
  %627 = vmatpush.msra.mxu0 %v35
  %628 = vmatpush.msra.mxu0 %v34
  %629 = vmatpush.msra.mxu0 %v33
  %630 = vmatpush.msra.mxu0 %v32
  %631 = vmatpush.msra.mxu0 %v31
  %632 = vmatpush.msra.mxu0 %v30
  %633 = vmatpush.msra.mxu0 %v29
  %634 = vmatmul.f32.gmra.mxu0 %v594
  %v635 = vpop.f32.mrf.mxu0
  %v636 = vadd.f32 0.0, %v635
  %637 = vmatmul.f32.gmra.mxu0 %v596
  %v638 = vpop.f32.mrf.mxu0
  %v639 = vadd.f32 0.0, %v638
  %640 = vmatmul.f32.gmra.mxu0 %v598
  %v641 = vpop.f32.mrf.mxu0
  %v642 = vadd.f32 0.0, %v641
  %643 = vmatmul.f32.gmra.mxu0 %v600
  %v644 = vpop.f32.mrf.mxu0
  %v645 = vadd.f32 0.0, %v644
  %646 = vdwg.mxu0
  %647 = vmatpush.msra.mxu0 %v60
  %648 = vmatpush.msra.mxu0 %v59
  %649 = vmatpush.msra.mxu0 %v58
  %650 = vmatpush.msra.mxu0 %v57
  %651 = vmatpush.msra.mxu0 %v56
  %652 = vmatpush.msra.mxu0 %v55
  %653 = vmatpush.msra.mxu0 %v54
  %654 = vmatpush.msra.mxu0 %v53
  %655 = vmatpush.msra.mxu0 %v52
  %656 = vmatpush.msra.mxu0 %v51
  %657 = vmatpush.msra.mxu0 %v50
  %658 = vmatpush.msra.mxu0 %v49
  %659 = vmatpush.msra.mxu0 %v48
  %660 = vmatpush.msra.mxu0 %v47
  %661 = vmatpush.msra.mxu0 %v46
  %662 = vmatpush.msra.mxu0 %v45
  %663 = vmatmul.f32.gmra.mxu0 %v595
  %v664 = vpop.f32.mrf.mxu0
  %v665 = vadd.f32 %v636, %v664
  %666 = vmatmul.f32.gmra.mxu0 %v597
  %v667 = vpop.f32.mrf.mxu0
  %v668 = vadd.f32 %v639, %v667
  %669 = vmatmul.f32.gmra.mxu0 %v599
  %v670 = vpop.f32.mrf.mxu0
  %v671 = vadd.f32 %v642, %v670
  %672 = vmatmul.f32.gmra.mxu0 %v601
  %v673 = vpop.f32.mrf.mxu0
  %v674 = vadd.f32 %v645, %v673
  %675 = vdwg.mxu0
  %678 = vrot.lane.b32.xlu0 %v665, 112
  %v679 = vpop.permute.xlu0 %678
  %680 = vrot.lane.b32.xlu0 %v668, 112
  %v681 = vpop.permute.xlu0 %680
  %684 = vrot.lane.b32.xlu0 %v665, 96
  %v685 = vpop.permute.xlu0 %684
  %686 = vrot.lane.b32.xlu0 %v668, 96
  %v687 = vpop.permute.xlu0 %686
  %690 = vrot.lane.b32.xlu0 %v665, 80
  %v691 = vpop.permute.xlu0 %690
  %692 = vrot.lane.b32.xlu0 %v668, 80
  %v693 = vpop.permute.xlu0 %692
  %696 = vrot.lane.b32.xlu0 %v665, 64
  %v697 = vpop.permute.xlu0 %696
  %698 = vrot.lane.b32.xlu0 %v668, 64
  %v699 = vpop.permute.xlu0 %698
  %704 = vrot.lane.b32.xlu0 %v671, 112
  %v705 = vpop.permute.xlu0 %704
  %706 = vrot.lane.b32.xlu0 %v674, 112
  %v707 = vpop.permute.xlu0 %706
  %710 = vrot.lane.b32.xlu0 %v671, 96
  %v711 = vpop.permute.xlu0 %710
  %712 = vrot.lane.b32.xlu0 %v674, 96
  %v713 = vpop.permute.xlu0 %712
  %716 = vrot.lane.b32.xlu0 %v671, 80
  %v717 = vpop.permute.xlu0 %716
  %718 = vrot.lane.b32.xlu0 %v674, 80
  %v719 = vpop.permute.xlu0 %718
  %722 = vrot.lane.b32.xlu0 %v671, 64
  %v723 = vpop.permute.xlu0 %722
  %724 = vrot.lane.b32.xlu0 %v674, 64
  %v725 = vpop.permute.xlu0 %724
  %v729 = vsel %vm361, %v603, 0
  %v732 = vsel %vm361, %v605, 0
  %v735 = vsel %vm361, %v607, 0
  %v738 = vsel %vm361, %v609, 0
  %v741 = vsel %vm361, %v611, 0
  %v744 = vsel %vm361, %v613, 0
  %746 = vmatpush.msra.mxu0 %v711
  %747 = vmatpush.msra.mxu0 %v707
  %748 = vmatpush.msra.mxu0 %v705
  %749 = vmatpush.msra.mxu0 %v674
  %750 = vmatpush.msra.mxu0 %v671
  %751 = vmatpush.msra.mxu0 1.0
  %752 = vmatpush.msra.mxu0 %v699
  %753 = vmatpush.msra.mxu0 %v697
  %754 = vmatpush.msra.mxu0 %v693
  %755 = vmatpush.msra.mxu0 %v691
  %756 = vmatpush.msra.mxu0 %v687
  %757 = vmatpush.msra.mxu0 %v685
  %758 = vmatpush.msra.mxu0 %v681
  %759 = vmatpush.msra.mxu0 %v679
  %760 = vmatpush.msra.mxu0 %v668
  %761 = vmatpush.msra.mxu0 %v665
  %762 = vmatmul.f32.gmra.mxu0 %v602
  %v763 = vpop.f32.mrf.mxu0
  %v764 = vadd.f32 0.0, %v763
  %765 = vmatmul.f32.gmra.mxu0 %v604
  %v766 = vpop.f32.mrf.mxu0
  %v767 = vadd.f32 0.0, %v766
  %768 = vmatmul.f32.gmra.mxu0 %v606
  %v769 = vpop.f32.mrf.mxu0
  %v770 = vadd.f32 0.0, %v769
  %771 = vmatmul.f32.gmra.mxu0 %v608
  %v772 = vpop.f32.mrf.mxu0
  %v773 = vadd.f32 0.0, %v772
  %774 = vmatmul.f32.gmra.mxu0 %v610
  %v775 = vpop.f32.mrf.mxu0
  %v776 = vadd.f32 0.0, %v775
  %777 = vmatmul.f32.gmra.mxu0 %v612
  %v778 = vpop.f32.mrf.mxu0
  %v779 = vadd.f32 0.0, %v778
  %780 = vdwg.mxu0
  %781 = vmatpush.msra.mxu0 0.0
  %782 = vmatpush.msra.mxu0 0.0
  %783 = vmatpush.msra.mxu0 0.0
  %784 = vmatpush.msra.mxu0 0.0
  %785 = vmatpush.msra.mxu0 0.0
  %786 = vmatpush.msra.mxu0 0.0
  %787 = vmatpush.msra.mxu0 0.0
  %788 = vmatpush.msra.mxu0 0.0
  %789 = vmatpush.msra.mxu0 0.0
  %790 = vmatpush.msra.mxu0 0.0
  %791 = vmatpush.msra.mxu0 1.0
  %792 = vmatpush.msra.mxu0 %v725
  %793 = vmatpush.msra.mxu0 %v723
  %794 = vmatpush.msra.mxu0 %v719
  %795 = vmatpush.msra.mxu0 %v717
  %796 = vmatpush.msra.mxu0 %v713
  %797 = vmatmul.f32.gmra.mxu0 %v729
  %v798 = vpop.f32.mrf.mxu0
  %v799 = vadd.f32 %v764, %v798
  %800 = vmatmul.f32.gmra.mxu0 %v732
  %v801 = vpop.f32.mrf.mxu0
  %v802 = vadd.f32 %v767, %v801
  %803 = vmatmul.f32.gmra.mxu0 %v735
  %v804 = vpop.f32.mrf.mxu0
  %v805 = vadd.f32 %v770, %v804
  %806 = vmatmul.f32.gmra.mxu0 %v738
  %v807 = vpop.f32.mrf.mxu0
  %v808 = vadd.f32 %v773, %v807
  %809 = vmatmul.f32.gmra.mxu0 %v741
  %v810 = vpop.f32.mrf.mxu0
  %v811 = vadd.f32 %v776, %v810
  %812 = vmatmul.f32.gmra.mxu0 %v744
  %v813 = vpop.f32.mrf.mxu0
  %v814 = vadd.f32 %v779, %v813
  %815 = vdwg.mxu0
  %818 = vrot.lane.b32.xlu0 %v805, 16
  %v819 = vpop.permute.xlu0 %818
  %820 = vrot.lane.b32.xlu0 %v808, 16
  %v821 = vpop.permute.xlu0 %820
  %826 = vrot.lane.b32.xlu0 %v811, 32
  %v827 = vpop.permute.xlu0 %826
  %828 = vrot.lane.b32.xlu0 %v814, 32
  %v829 = vpop.permute.xlu0 %828
  %v832 = vsel %vm351, %v799, %v819
  %v833 = vsel %vm351, %v802, %v821
  %v834 = vsel %vm356, %v832, %v827
  %v835 = vsel %vm356, %v833, %v829
  %v837 = vsel %vm361, %v834, 0
  %v840 = vsel %vm361, %v835, 0
  %842 = vmatpush.msra.mxu0 0.0
  %843 = vmatpush.msra.mxu0 0.0
  %844 = vmatpush.msra.mxu0 0.0
  %845 = vmatpush.msra.mxu0 0.0
  %846 = vmatpush.msra.mxu0 0.0
  %847 = vmatpush.msra.mxu0 0.0
  %848 = vmatpush.msra.mxu0 0.0
  %849 = vmatpush.msra.mxu0 0.0
  %850 = vmatpush.msra.mxu0 0.0
  %851 = vmatpush.msra.mxu0 0.0
  %852 = vmatpush.msra.mxu0 %v71
  %853 = vmatpush.msra.mxu0 %v69
  %854 = vmatpush.msra.mxu0 %v67
  %855 = vmatpush.msra.mxu0 %v65
  %856 = vmatpush.msra.mxu0 %v63
  %857 = vmatpush.msra.mxu0 %v61
  %858 = vmatmul.f32.gmra.mxu0 %v837
  %v859 = vpop.f32.mrf.mxu0
  %v860 = vadd.f32 0.0, %v859
  %861 = vmatmul.f32.gmra.mxu0 %v840
  %v862 = vpop.f32.mrf.mxu0
  %v863 = vadd.f32 0.0, %v862
  %864 = vdwg.mxu0
  %865 = vmatpush.msra.mxu0 0.0
  %866 = vmatpush.msra.mxu0 0.0
  %867 = vmatpush.msra.mxu0 0.0
  %868 = vmatpush.msra.mxu0 0.0
  %869 = vmatpush.msra.mxu0 0.0
  %870 = vmatpush.msra.mxu0 0.0
  %871 = vmatpush.msra.mxu0 0.0
  %872 = vmatpush.msra.mxu0 0.0
  %873 = vmatpush.msra.mxu0 0.0
  %874 = vmatpush.msra.mxu0 0.0
  %875 = vmatpush.msra.mxu0 %v72
  %876 = vmatpush.msra.mxu0 %v70
  %877 = vmatpush.msra.mxu0 %v68
  %878 = vmatpush.msra.mxu0 %v66
  %879 = vmatpush.msra.mxu0 %v64
  %880 = vmatpush.msra.mxu0 %v62
  %881 = vmatmul.f32.gmra.mxu0 %v837
  %v882 = vpop.f32.mrf.mxu0
  %v883 = vadd.f32 0.0, %v882
  %884 = vmatmul.f32.gmra.mxu0 %v840
  %v885 = vpop.f32.mrf.mxu0
  %v886 = vadd.f32 0.0, %v885
  %887 = vdwg.mxu0
  %v889 = vsel %vm356, %v614, 0
  %v892 = vsel %vm356, %v615, 0
  %v895 = vsel %vm356, %v616, 0
  %v898 = vsel %vm356, %v617, 0
  %900 = vmatpush.msra.mxu0 0.0
  %901 = vmatpush.msra.mxu0 0.0
  %902 = vmatpush.msra.mxu0 0.0
  %903 = vmatpush.msra.mxu0 0.0
  %904 = vmatpush.msra.mxu0 0.0
  %905 = vmatpush.msra.mxu0 0.0
  %906 = vmatpush.msra.mxu0 0.0
  %907 = vmatpush.msra.mxu0 0.0
  %908 = vmatpush.msra.mxu0 0.0
  %909 = vmatpush.msra.mxu0 0.0
  %910 = vmatpush.msra.mxu0 0.0
  %911 = vmatpush.msra.mxu0 0.0
  %912 = vmatpush.msra.mxu0 %v600
  %913 = vmatpush.msra.mxu0 %v598
  %914 = vmatpush.msra.mxu0 %v596
  %915 = vmatpush.msra.mxu0 %v594
  %916 = vmatmul.f32.gmra.mxu0 %v889
  %v917 = vpop.f32.mrf.mxu0
  %v918 = vadd.f32 0.0, %v917
  %919 = vmatmul.f32.gmra.mxu0 %v892
  %v920 = vpop.f32.mrf.mxu0
  %v921 = vadd.f32 0.0, %v920
  %922 = vmatmul.f32.gmra.mxu0 %v895
  %v923 = vpop.f32.mrf.mxu0
  %v924 = vadd.f32 0.0, %v923
  %925 = vmatmul.f32.gmra.mxu0 %v898
  %v926 = vpop.f32.mrf.mxu0
  %v927 = vadd.f32 0.0, %v926
  %928 = vdwg.mxu0
  %929 = vmatpush.msra.mxu0 0.0
  %930 = vmatpush.msra.mxu0 0.0
  %931 = vmatpush.msra.mxu0 0.0
  %932 = vmatpush.msra.mxu0 0.0
  %933 = vmatpush.msra.mxu0 0.0
  %934 = vmatpush.msra.mxu0 0.0
  %935 = vmatpush.msra.mxu0 0.0
  %936 = vmatpush.msra.mxu0 0.0
  %937 = vmatpush.msra.mxu0 0.0
  %938 = vmatpush.msra.mxu0 0.0
  %939 = vmatpush.msra.mxu0 0.0
  %940 = vmatpush.msra.mxu0 0.0
  %941 = vmatpush.msra.mxu0 %v601
  %942 = vmatpush.msra.mxu0 %v599
  %943 = vmatpush.msra.mxu0 %v597
  %944 = vmatpush.msra.mxu0 %v595
  %945 = vmatmul.f32.gmra.mxu0 %v889
  %v946 = vpop.f32.mrf.mxu0
  %v947 = vadd.f32 0.0, %v946
  %948 = vmatmul.f32.gmra.mxu0 %v892
  %v949 = vpop.f32.mrf.mxu0
  %v950 = vadd.f32 0.0, %v949
  %951 = vmatmul.f32.gmra.mxu0 %v895
  %v952 = vpop.f32.mrf.mxu0
  %v953 = vadd.f32 0.0, %v952
  %954 = vmatmul.f32.gmra.mxu0 %v898
  %v955 = vpop.f32.mrf.mxu0
  %v956 = vadd.f32 0.0, %v955
  %957 = vdwg.mxu0
  %958 = vmatpush.msra.mxu0 %v103
  %959 = vmatpush.msra.mxu0 %v101
  %960 = vmatpush.msra.mxu0 %v99
  %961 = vmatpush.msra.mxu0 %v97
  %962 = vmatpush.msra.mxu0 %v95
  %963 = vmatpush.msra.mxu0 %v93
  %964 = vmatpush.msra.mxu0 %v91
  %965 = vmatpush.msra.mxu0 %v89
  %966 = vmatpush.msra.mxu0 %v87
  %967 = vmatpush.msra.mxu0 %v85
  %968 = vmatpush.msra.mxu0 %v83
  %969 = vmatpush.msra.mxu0 %v81
  %970 = vmatpush.msra.mxu0 %v79
  %971 = vmatpush.msra.mxu0 %v77
  %972 = vmatpush.msra.mxu0 %v75
  %973 = vmatpush.msra.mxu0 %v73
  %974 = vmatmul.f32.gmra.mxu0 %v924
  %v975 = vpop.f32.mrf.mxu0
  %v976 = vadd.f32 0.0, %v975
  %977 = vmatmul.f32.gmra.mxu0 %v927
  %v978 = vpop.f32.mrf.mxu0
  %v979 = vadd.f32 0.0, %v978
  %980 = vdwg.mxu0
  %981 = vmatpush.msra.mxu0 %v135
  %982 = vmatpush.msra.mxu0 %v133
  %983 = vmatpush.msra.mxu0 %v131
  %984 = vmatpush.msra.mxu0 %v129
  %985 = vmatpush.msra.mxu0 %v127
  %986 = vmatpush.msra.mxu0 %v125
  %987 = vmatpush.msra.mxu0 %v123
  %988 = vmatpush.msra.mxu0 %v121
  %989 = vmatpush.msra.mxu0 %v119
  %990 = vmatpush.msra.mxu0 %v117
  %991 = vmatpush.msra.mxu0 %v115
  %992 = vmatpush.msra.mxu0 %v113
  %993 = vmatpush.msra.mxu0 %v111
  %994 = vmatpush.msra.mxu0 %v109
  %995 = vmatpush.msra.mxu0 %v107
  %996 = vmatpush.msra.mxu0 %v105
  %997 = vmatmul.f32.gmra.mxu0 %v953
  %v998 = vpop.f32.mrf.mxu0
  %v999 = vadd.f32 %v976, %v998
  %1000 = vmatmul.f32.gmra.mxu0 %v956
  %v1001 = vpop.f32.mrf.mxu0
  %v1002 = vadd.f32 %v979, %v1001
  %1003 = vdwg.mxu0
  %1004 = vmatpush.msra.mxu0 %v104
  %1005 = vmatpush.msra.mxu0 %v102
  %1006 = vmatpush.msra.mxu0 %v100
  %1007 = vmatpush.msra.mxu0 %v98
  %1008 = vmatpush.msra.mxu0 %v96
  %1009 = vmatpush.msra.mxu0 %v94
  %1010 = vmatpush.msra.mxu0 %v92
  %1011 = vmatpush.msra.mxu0 %v90
  %1012 = vmatpush.msra.mxu0 %v88
  %1013 = vmatpush.msra.mxu0 %v86
  %1014 = vmatpush.msra.mxu0 %v84
  %1015 = vmatpush.msra.mxu0 %v82
  %1016 = vmatpush.msra.mxu0 %v80
  %1017 = vmatpush.msra.mxu0 %v78
  %1018 = vmatpush.msra.mxu0 %v76
  %1019 = vmatpush.msra.mxu0 %v74
  %1020 = vmatmul.f32.gmra.mxu0 %v924
  %v1021 = vpop.f32.mrf.mxu0
  %v1022 = vadd.f32 0.0, %v1021
  %1023 = vmatmul.f32.gmra.mxu0 %v927
  %v1024 = vpop.f32.mrf.mxu0
  %v1025 = vadd.f32 0.0, %v1024
  %1026 = vdwg.mxu0
  %1027 = vmatpush.msra.mxu0 %v136
  %1028 = vmatpush.msra.mxu0 %v134
  %1029 = vmatpush.msra.mxu0 %v132
  %1030 = vmatpush.msra.mxu0 %v130
  %1031 = vmatpush.msra.mxu0 %v128
  %1032 = vmatpush.msra.mxu0 %v126
  %1033 = vmatpush.msra.mxu0 %v124
  %1034 = vmatpush.msra.mxu0 %v122
  %1035 = vmatpush.msra.mxu0 %v120
  %1036 = vmatpush.msra.mxu0 %v118
  %1037 = vmatpush.msra.mxu0 %v116
  %1038 = vmatpush.msra.mxu0 %v114
  %1039 = vmatpush.msra.mxu0 %v112
  %1040 = vmatpush.msra.mxu0 %v110
  %1041 = vmatpush.msra.mxu0 %v108
  %1042 = vmatpush.msra.mxu0 %v106
  %1043 = vmatmul.f32.gmra.mxu0 %v953
  %v1044 = vpop.f32.mrf.mxu0
  %v1045 = vadd.f32 %v1022, %v1044
  %1046 = vmatmul.f32.gmra.mxu0 %v956
  %v1047 = vpop.f32.mrf.mxu0
  %v1048 = vadd.f32 %v1025, %v1047
  %1049 = vdwg.mxu0
  %v1050 = vadd.f32 %v918, %v999
  %v1051 = vadd.f32 %v947, %v1045
  %v1052 = vadd.f32 %v921, %v1002
  %v1053 = vadd.f32 %v950, %v1048
  %v1054 = vadd.f32 %v1050, %v860
  %v1055 = vadd.f32 %v1051, %v883
  %v1056 = vadd.f32 %v1052, %v863
  %v1057 = vadd.f32 %v1053, %v886
  %v1058 = vmax.f32 %v1054, 0.0
  %v1059 = vmax.f32 %v1055, 0.0
  %v1060 = vmax.f32 %v1056, 0.0
  %v1061 = vmax.f32 %v1057, 0.0
  %1062 = vst [vmem:[%s8] sm:$0xff] %v1058
  %1063 = vst [vmem:[%s8 + $0x8] sm:$0xff] %v1059
  %1064 = vst [vmem:[%s8 + $0x10] sm:$0xff] %v1060
  %1065 = vst [vmem:[%s8 + $0x18] sm:$0xff] %v1061
  // Predicated region
  $region34: #{_lambda_.1} parent=0 // pred_check
    _
  $region35: #{_lambda_.1} parent=0 // pred_check_branch
    %1067 = sbr.rel (0) target = $region37
  $region36: #{_lambda_.1} parent=0 // pred_region
    _
  $region37: #{_lambda_.1} parent=0 // pred_fallthru
    _
  // Predicated region
  $region38: #{_lambda_.1} parent=0 // pred_check
    _
  $region39: #{_lambda_.1} parent=0 // pred_check_branch
    %1069 = sbr.rel (0) target = $region41
  $region40: #{_lambda_.1} parent=0 // pred_region
    _
  $region41: #{_lambda_.1} parent=0 // pred_fallthru
    _

</llo_original>
